<compile_context>
chip_gen: v7x
topology: tpu7x:2x2x1
jax: 0.10.0
libtpu: 0.0.40
codegen_flags: <defaults>
</compile_context>

<pallas_src>
import math
import functools

import jax
import jax.numpy as jnp
from jax.experimental import pallas as pl
from jax.experimental.pallas import tpu as pltpu


def _round_up(x, m):
    return (x + m - 1) // m * m


def _rbm_kernel(x_ref, w_ref, c_ref, u_ref, hidden_ref, sample_ref, acc_ref):
    """Grid = (batch tiles, hidden tiles, visible tiles); visible is the reduction."""
    k = pl.program_id(2)

    @pl.when(k == 0)
    def _():
        acc_ref[...] = jnp.zeros_like(acc_ref)

    # MXU matmul on bf16 operands, f32 accumulation.
    acc_ref[...] += jnp.dot(x_ref[...], w_ref[...],
                            preferred_element_type=jnp.float32)

    @pl.when(k == pl.num_programs(2) - 1)
    def _():
        p = jax.nn.sigmoid(acc_ref[...] + c_ref[...])   # (TB, TH) + (1, TH)
        hidden_ref[...] = p
        # Bernoulli: sample = 1[u < p], u ~ U[0,1) supplied from the wrapper.
        sample_ref[...] = (u_ref[...] < p).astype(sample_ref.dtype)


@jax.jit
def rbm_forward(x, weight, c, uniform):
    """x: (B, V) f32, weight: (V, H) f32, c: (H,) f32, uniform: (B, H) f32 in [0,1)."""
    B, V = x.shape
    H = weight.shape[1]

    # Tile sizes: full (padded) dim when small, capped for large problems.
    # Caps are multiples of the (8,128) alignment, so padded dims divide evenly.
    TB = min(_round_up(B, 8), 256)
    TK = min(_round_up(V, 128), 512)
    TH = min(_round_up(H, 128), 512)

    B_pad = _round_up(B, TB)
    V_pad = _round_up(V, TK)
    H_pad = _round_up(H, TH)

    # Pad + cast MXU operands to bf16 (halves HBM bytes for W and X).
    x_p = jnp.zeros((B_pad, V_pad), jnp.bfloat16).at[:B, :V].set(x.astype(jnp.bfloat16))
    w_p = jnp.zeros((V_pad, H_pad), jnp.bfloat16).at[:V, :H].set(weight.astype(jnp.bfloat16))
    c_p = jnp.zeros((1, H_pad), jnp.float32).at[0, :H].set(c.astype(jnp.float32))
    u_p = jnp.ones((B_pad, H_pad), jnp.float32).at[:B, :H].set(uniform.astype(jnp.float32))

    grid = (B_pad // TB, H_pad // TH, V_pad // TK)

    cost = pl.CostEstimate(
        flops=2 * B_pad * V_pad * H_pad,
        transcendentals=B_pad * H_pad,                       # sigmoid exp
        bytes_accessed=(x_p.size * 2 + w_p.size * 2 + c_p.size * 4
                        + u_p.size * 4 + B_pad * H_pad * 4 + B_pad * H_pad * 2),
    )

    hidden_p, sample_p = pl.pallas_call(
        _rbm_kernel,
        out_shape=(
            jax.ShapeDtypeStruct((B_pad, H_pad), jnp.float32),   # probabilities
            jax.ShapeDtypeStruct((B_pad, H_pad), jnp.bfloat16),  # {0,1} samples
        ),
        grid_spec=pltpu.PrefetchScalarGridSpec(
            num_scalar_prefetch=0,
            grid=grid,
            in_specs=[
                pl.BlockSpec((TB, TK), lambda b, h, k: (b, k)),   # X tile
                pl.BlockSpec((TK, TH), lambda b, h, k: (k, h)),   # W tile
                pl.BlockSpec((1, TH), lambda b, h, k: (0, h)),    # bias c
                pl.BlockSpec((TB, TH), lambda b, h, k: (b, h)),   # uniforms
            ],
            out_specs=[
                pl.BlockSpec((TB, TH), lambda b, h, k: (b, h)),
                pl.BlockSpec((TB, TH), lambda b, h, k: (b, h)),
            ],
            scratch_shapes=[pltpu.VMEM((TB, TH), jnp.float32)],   # f32 accumulator
        ),
        compiler_params=pltpu.CompilerParams(
            dimension_semantics=("parallel", "parallel", "arbitrary"),
        ),
        cost_estimate=cost,
    )(x_p, w_p, c_p, u_p)

    hidden = hidden_p[:B, :H]
    sample_h = sample_p[:B, :H].astype(jnp.float32)
    return hidden, sample_h


if __name__ == "__main__":
    # Module defaults: visible_units=26, hidden_units=9, BATCH_SIZE=20.
    visible_units, hidden_units, batch = 26, 9, 20

    key = jax.random.PRNGKey(0)
    k_w, k_c, k_b, k_x, k_u = jax.random.split(key, 5)

    # Deterministic parameter init mirroring the PyTorch __init__.
    weight = jax.random.normal(k_w, (visible_units, hidden_units), jnp.float32) / math.sqrt(visible_units)
    c = jax.random.normal(k_c, (hidden_units,), jnp.float32) / math.sqrt(hidden_units)
    b = jax.random.normal(k_b, (visible_units,), jnp.float32) / math.sqrt(visible_units)  # unused in forward

    # Visible-layer probabilities as input data; uniforms for Bernoulli sampling.
    x = jax.random.uniform(k_x, (batch, visible_units), jnp.float32)
    u = jax.random.uniform(k_u, (batch, hidden_units), jnp.float32)

    hidden, sample_h = rbm_forward(x, weight, c, u)
    jax.block_until_ready((hidden, sample_h))

    # Sanity checks: probabilities match jnp reference (bf16 MXU operands ->
    # loose atol), samples are binary and consistent with the supplied uniforms.
    ref = jax.nn.sigmoid(x @ weight + c)
    assert hidden.shape == (batch, hidden_units)
    assert sample_h.shape == (batch, hidden_units)
    assert jnp.allclose(hidden, ref, atol=2e-2), float(jnp.max(jnp.abs(hidden - ref)))
    assert bool(jnp.all((sample_h == 0.0) | (sample_h == 1.0)))
    assert bool(jnp.all(sample_h == (u < hidden).astype(jnp.float32)))

    print("KERNEL_OK")
</pallas_src>

<mosaic_0001>
module attributes {stable_mosaic.version = 11 : i64} {
  func.func @_rbm_kernel(%arg0: i32, %arg1: i32, %arg2: i32, %arg3: memref<24x128xbf16, #tpu.memory_space<vmem>>, %arg4: memref<128x128xbf16, #tpu.memory_space<vmem>>, %arg5: memref<1x128xf32, #tpu.memory_space<vmem>>, %arg6: memref<24x128xf32, #tpu.memory_space<vmem>>, %arg7: memref<24x128xf32, #tpu.memory_space<vmem>>, %arg8: memref<24x128xbf16, #tpu.memory_space<vmem>>, %arg9: memref<24x128xf32, #tpu.memory_space<vmem>>) attributes {dimension_semantics = [#tpu.dimension_semantics<parallel>, #tpu.dimension_semantics<parallel>, #tpu.dimension_semantics<arbitrary>], iteration_bounds = array<i64: 1, 1, 1>, scalar_prefetch = 0 : i64, scratch_operands = 1 : i64, tpu.core_type = #tpu.core_type<tc>, window_params = [{transform_indices = @transform_0, window_bounds = array<i64: 24, 128>}, {transform_indices = @transform_1, window_bounds = array<i64: 128, 128>}, {transform_indices = @transform_2, window_bounds = array<i64: 1, 128>}, {transform_indices = @transform_3, window_bounds = array<i64: 24, 128>}, {transform_indices = @transform_4, window_bounds = array<i64: 24, 128>}, {transform_indices = @transform_5, window_bounds = array<i64: 24, 128>}]} {
    %c0_i32 = arith.constant 0 : i32
    %0 = arith.cmpi eq, %arg2, %c0_i32 : i32
    %1 = arith.extui %0 : i1 to i32
    %c0_i32_0 = arith.constant 0 : i32
    %2 = arith.cmpi ne, %1, %c0_i32_0 : i32
    scf.if %2 {
      %cst_10 = arith.constant 0.000000e+00 : f32
      %12 = vector.broadcast %cst_10 : f32 to vector<24x128xf32>
      %c0_11 = arith.constant 0 : index
      %c0_12 = arith.constant 0 : index
      %13 = vector.load %arg9[%c0_11, %c0_12] : memref<24x128xf32, #tpu.memory_space<vmem>>, vector<24x128xf32>
      tpu.vector_store %arg9[%c0_11, %c0_12], %12 {strides = array<i32>} : memref<24x128xf32, #tpu.memory_space<vmem>>, vector<24x128xf32>,
    } else {
    }
    %c0 = arith.constant 0 : index
    %c0_1 = arith.constant 0 : index
    %3 = vector.load %arg9[%c0, %c0_1] : memref<24x128xf32, #tpu.memory_space<vmem>>, vector<24x128xf32>
    %c0_2 = arith.constant 0 : index
    %c0_3 = arith.constant 0 : index
    %4 = vector.load %arg3[%c0_2, %c0_3] : memref<24x128xbf16, #tpu.memory_space<vmem>>, vector<24x128xbf16>
    %c0_4 = arith.constant 0 : index
    %c0_5 = arith.constant 0 : index
    %5 = vector.load %arg4[%c0_4, %c0_5] : memref<128x128xbf16, #tpu.memory_space<vmem>>, vector<128x128xbf16>
    %cst = arith.constant dense<0.000000e+00> : vector<24x128xf32>
    %6 = tpu.matmul %4, %5, %cst {dimension_numbers = #tpu.dot_dimension_numbers<[1], [0], [0], [1], [0, 0, 1, 1], [], []>} : vector<24x128xbf16>, vector<128x128xbf16>, vector<24x128xf32> -> vector<24x128xf32>
    %7 = arith.addf %3, %6 : vector<24x128xf32>
    %c0_6 = arith.constant 0 : index
    %c0_7 = arith.constant 0 : index
    %8 = vector.load %arg9[%c0_6, %c0_7] : memref<24x128xf32, #tpu.memory_space<vmem>>, vector<24x128xf32>
    tpu.vector_store %arg9[%c0_6, %c0_7], %7 {strides = array<i32>} : memref<24x128xf32, #tpu.memory_space<vmem>>, vector<24x128xf32>,
    %c0_i32_8 = arith.constant 0 : i32
    %9 = arith.cmpi eq, %arg2, %c0_i32_8 : i32
    %10 = arith.extui %9 : i1 to i32
    %c0_i32_9 = arith.constant 0 : i32
    %11 = arith.cmpi ne, %10, %c0_i32_9 : i32
    scf.if %11 {
      %c0_10 = arith.constant 0 : index
      %c0_11 = arith.constant 0 : index
      %12 = vector.load %arg9[%c0_10, %c0_11] : memref<24x128xf32, #tpu.memory_space<vmem>>, vector<24x128xf32>
      %c0_12 = arith.constant 0 : index
      %c0_13 = arith.constant 0 : index
      %13 = vector.load %arg5[%c0_12, %c0_13] : memref<1x128xf32, #tpu.memory_space<vmem>>, vector<1x128xf32>
      %14 = vector.broadcast %13 : vector<1x128xf32> to vector<24x128xf32>
      %15 = arith.addf %12, %14 : vector<24x128xf32>
      %16 = arith.negf %15 : vector<24x128xf32>
      %17 = math.exp %16 : vector<24x128xf32>
      %cst_14 = arith.constant 1.000000e+00 : f32
      %18 = vector.broadcast %cst_14 : f32 to vector<24x128xf32>
      %19 = arith.addf %18, %17 : vector<24x128xf32>
      %20 = arith.divf %18, %19 : vector<24x128xf32>
      %c0_15 = arith.constant 0 : index
      %c0_16 = arith.constant 0 : index
      %21 = vector.load %arg7[%c0_15, %c0_16] : memref<24x128xf32, #tpu.memory_space<vmem>>, vector<24x128xf32>
      tpu.vector_store %arg7[%c0_15, %c0_16], %20 {strides = array<i32>} : memref<24x128xf32, #tpu.memory_space<vmem>>, vector<24x128xf32>,
      %c0_17 = arith.constant 0 : index
      %c0_18 = arith.constant 0 : index
      %22 = vector.load %arg6[%c0_17, %c0_18] : memref<24x128xf32, #tpu.memory_space<vmem>>, vector<24x128xf32>
      %23 = arith.cmpf olt, %22, %20 : vector<24x128xf32>
      %24 = arith.extui %23 : vector<24x128xi1> to vector<24x128xi32>
      %25 = arith.sitofp %24 : vector<24x128xi32> to vector<24x128xf32>
      %26 = arith.truncf %25 : vector<24x128xf32> to vector<24x128xbf16>
      %c0_19 = arith.constant 0 : index
      %c0_20 = arith.constant 0 : index
      %27 = vector.load %arg8[%c0_19, %c0_20] : memref<24x128xbf16, #tpu.memory_space<vmem>>, vector<24x128xbf16>
      tpu.vector_store %arg8[%c0_19, %c0_20], %26 {strides = array<i32>} : memref<24x128xbf16, #tpu.memory_space<vmem>>, vector<24x128xbf16>,
    } else {
    }
    return
  }
  func.func @transform_0(%arg0: i32, %arg1: i32, %arg2: i32) -> (i32, i32) {
    %c0_i32 = arith.constant 0 : i32
    return %arg0, %arg2 : i32, i32
  }
  func.func @transform_1(%arg0: i32, %arg1: i32, %arg2: i32) -> (i32, i32) {
    %c0_i32 = arith.constant 0 : i32
    return %arg2, %arg1 : i32, i32
  }
  func.func @transform_2(%arg0: i32, %arg1: i32, %arg2: i32) -> (i32, i32) {
    %c0_i32 = arith.constant 0 : i32
    %c0_i32_0 = arith.constant 0 : i32
    return %c0_i32, %arg1 : i32, i32
  }
  func.func @transform_3(%arg0: i32, %arg1: i32, %arg2: i32) -> (i32, i32) {
    %c0_i32 = arith.constant 0 : i32
    return %arg0, %arg1 : i32, i32
  }
  func.func @transform_4(%arg0: i32, %arg1: i32, %arg2: i32) -> (i32, i32) {
    %c0_i32 = arith.constant 0 : i32
    return %arg0, %arg1 : i32, i32
  }
  func.func @transform_5(%arg0: i32, %arg1: i32, %arg2: i32) -> (i32, i32) {
    %c0_i32 = arith.constant 0 : i32
    return %arg0, %arg1 : i32, i32
  }
}

</mosaic_0001>

<llo_original>
// kernel: rbm_forward.1
$region0: #{rbm_forward.1}
  #allocation0 [shape = 'u32[]', space=smem, size = 0x4, offset = 0x4, fixed_abs, tag = 'smem constant byte address 0x4 - core index']
  #allocation1 [shape = 'u32[144,128]{1,0:T(1,128)}', space=vmem, size = 0x12000, scoped, tag = 'internal scratch']
  #allocation2 [shape = 'f32[24,128]{1,0:T(8,128)}', space=vmem, size = 0x3000, scoped, tag = 'scratch operand']
  %s0 = inlined_call_operand.vmem [shape: bf16[24,128], index: 0, kind: input, shape index: {}]
  %s1 = inlined_call_operand.vmem [shape: bf16[128,128], index: 1, kind: input, shape index: {}]
  %s2 = inlined_call_operand.vmem [shape: f32[1,128], index: 2, kind: input, shape index: {}]
  %s3 = inlined_call_operand.vmem [shape: f32[24,128], index: 3, kind: input, shape index: {}]
  %s4 = inlined_call_operand.vmem [shape: f32[24,128], index: 4, kind: output, shape index: {0}]
  %s5 = inlined_call_operand.vmem [shape: bf16[24,128], index: 5, kind: output, shape index: {1}]
  %6 = xla_tuple %s4, %s5
  %s7 = sld [smem:[#allocation0]]
  $region42: #{rbm_forward.1} parent=0
    _
  %s9 = ssub.s32 1, %s7
  %s10 = scalar_select 0, %s9, %s7
  // Predicated region
  $region2: #{rbm_forward.1} parent=0 // pred_check
    _
  $region3: #{rbm_forward.1} parent=0 // pred_check_branch
    %12 = sbr.rel (0) target = $region5
  $region4: #{rbm_forward.1} parent=0 // pred_region
    _
  $region5: #{rbm_forward.1} parent=0 // pred_fallthru
    _
  // Predicated region
  $region6: #{rbm_forward.1} parent=0 // pred_check
    _
  $region7: #{rbm_forward.1} parent=0 // pred_check_branch
    %14 = sbr.rel (0) target = $region9
  $region8: #{rbm_forward.1} parent=0 // pred_region
    _
  $region9: #{rbm_forward.1} parent=0 // pred_fallthru
    _
  // Predicated region
  $region10: #{rbm_forward.1} parent=0 // pred_check
    _
  $region11: #{rbm_forward.1} parent=0 // pred_check_branch
    %16 = sbr.rel (0) target = $region13
  $region12: #{rbm_forward.1} parent=0 // pred_region
    _
  $region13: #{rbm_forward.1} parent=0 // pred_fallthru
    _
  // Predicated region
  $region14: #{rbm_forward.1} parent=0 // pred_check
    _
  $region15: #{rbm_forward.1} parent=0 // pred_check_branch
    %18 = sbr.rel (0) target = $region17
  $region16: #{rbm_forward.1} parent=0 // pred_region
    _
  $region17: #{rbm_forward.1} parent=0 // pred_fallthru
    _
  %p20 = scmp.eq.s32.totalorder 0, 0
  // Predicated region
  $region18: #{rbm_forward.1} parent=0 // pred_check
    %p21 = pneg %p20
  $region19: #{rbm_forward.1} parent=0 // pred_check_branch
    %23 = sbr.rel (%p21) target = $region21
  $region20: #{rbm_forward.1} parent=0 // pred_region
    %24 = vst [vmem:[#allocation2] sm:$0xff] 0.0
    %25 = vst [vmem:[#allocation2 + $0x8] sm:$0xff] 0.0
    %26 = vst [vmem:[#allocation2 + $0x10] sm:$0xff] 0.0
  $region21: #{rbm_forward.1} parent=0 // pred_fallthru
    _
  %v27 = vld [vmem:[#allocation2] sm:$0xff]
  %v28 = vld [vmem:[#allocation2 + $0x8] sm:$0xff]
  %v29 = vld [vmem:[#allocation2 + $0x10] sm:$0xff]
  %v30 = vld [vmem:[%s0] sm:$0xf]
  %v31 = vld [vmem:[%s0 + $0x4] sm:$0xf]
  %v32 = vld [vmem:[%s0 + $0x8] sm:$0xf]
  %v33 = vld [vmem:[%s1] sm:$0xf]
  %v34 = vld [vmem:[%s1 + $0x4] sm:$0xf]
  %v35 = vld [vmem:[%s1 + $0x8] sm:$0xf]
  %v36 = vld [vmem:[%s1 + $0xc] sm:$0xf]
  %v37 = vld [vmem:[%s1 + $0x10] sm:$0xf]
  %v38 = vld [vmem:[%s1 + $0x14] sm:$0xf]
  %v39 = vld [vmem:[%s1 + $0x18] sm:$0xf]
  %v40 = vld [vmem:[%s1 + $0x1c] sm:$0xf]
  %v41 = vld [vmem:[%s1 + $0x20] sm:$0xf]
  %v42 = vld [vmem:[%s1 + $0x24] sm:$0xf]
  %v43 = vld [vmem:[%s1 + $0x28] sm:$0xf]
  %v44 = vld [vmem:[%s1 + $0x2c] sm:$0xf]
  %v45 = vld [vmem:[%s1 + $0x30] sm:$0xf]
  %v46 = vld [vmem:[%s1 + $0x34] sm:$0xf]
  %v47 = vld [vmem:[%s1 + $0x38] sm:$0xf]
  %v48 = vld [vmem:[%s1 + $0x3c] sm:$0xf]
  %v52 = vunpack.c.l.b16 %v30
  %v53 = vunpack.c.l.b16 %v31
  %v54 = vunpack.c.l.b16 %v32
  %v55 = vpack.c.b16 %v53, %v52
  %v56 = vpack.c.b16 %v54, %v54
  %v75 = vunpack.c.l.b16 %v33
  %v76 = vunpack.c.l.b16 %v34
  %v77 = vunpack.c.l.b16 %v35
  %v78 = vunpack.c.l.b16 %v36
  %v79 = vunpack.c.l.b16 %v37
  %v80 = vunpack.c.l.b16 %v38
  %v81 = vunpack.c.l.b16 %v39
  %v82 = vunpack.c.l.b16 %v40
  %v83 = vunpack.c.l.b16 %v41
  %v84 = vunpack.c.l.b16 %v42
  %v85 = vunpack.c.l.b16 %v43
  %v86 = vunpack.c.l.b16 %v44
  %v87 = vunpack.c.l.b16 %v45
  %v88 = vunpack.c.l.b16 %v46
  %v89 = vunpack.c.l.b16 %v47
  %v90 = vunpack.c.l.b16 %v48
  %v91 = vpack.c.b16 %v76, %v75
  %v92 = vpack.c.b16 %v78, %v77
  %v93 = vpack.c.b16 %v80, %v79
  %v94 = vpack.c.b16 %v82, %v81
  %v95 = vpack.c.b16 %v84, %v83
  %v96 = vpack.c.b16 %v86, %v85
  %v97 = vpack.c.b16 %v88, %v87
  %v98 = vpack.c.b16 %v90, %v89
  %107 = vmatprep.subr.bf16.mxu0 0
  %108 = vmatpush1.bf16.msra.mxu0 %v91
  %109 = vmatprep.subr.bf16.mxu0 0
  %110 = vmatpush1.bf16.msra.mxu0 %v92
  %111 = vmatprep.subr.bf16.mxu0 0
  %112 = vmatpush1.bf16.msra.mxu0 %v93
  %113 = vmatprep.subr.bf16.mxu0 0
  %114 = vmatpush1.bf16.msra.mxu0 %v94
  %115 = vmatprep.subr.bf16.mxu0 0
  %116 = vmatpush1.bf16.msra.mxu0 %v95
  %117 = vmatprep.subr.bf16.mxu0 0
  %118 = vmatpush1.bf16.msra.mxu0 %v96
  %119 = vmatprep.subr.bf16.mxu0 0
  %120 = vmatpush1.bf16.msra.mxu0 %v97
  %121 = vmatprep.subr.bf16.mxu0 0
  %122 = vmatpush1.bf16.msra.mxu0 %v98
  %123 = vmatprep.subr.bf16.mxu0 0
  %124 = vmatpush1.bf16.msra.mxu0 0
  %125 = vmatprep.subr.bf16.mxu0 0
  %126 = vmatpush1.bf16.msra.mxu0 0
  %127 = vmatprep.subr.bf16.mxu0 0
  %128 = vmatpush1.bf16.msra.mxu0 0
  %129 = vmatprep.subr.bf16.mxu0 0
  %130 = vmatpush1.bf16.msra.mxu0 0
  %131 = vmatprep.subr.bf16.mxu0 0
  %132 = vmatpush1.bf16.msra.mxu0 0
  %133 = vmatprep.subr.bf16.mxu0 0
  %134 = vmatpush1.bf16.msra.mxu0 0
  %135 = vmatprep.subr.bf16.mxu0 0
  %136 = vmatpush1.bf16.msra.mxu0 0
  %137 = vmatprep.subr.bf16.mxu0 0
  %138 = vmatpush1.bf16.msra.mxu0 0
  %139 = vmatprep.mubr.bf16.mxu0 0
  %140 = vmatmul.mubr.bf16.gmra.mrb[0].mxu0 %v55
  %v141 = vpop.f32.mrb[0].mxu0
  %v142 = vadd.f32 0.0, %v141
  %v143 = vpop.f32.mrb[0].mxu0
  %v144 = vpop.f32.mrb[0].mxu0
  %v145 = vadd.f32 0.0, %v144
  %v146 = vpop.f32.mrb[0].mxu0
  %147 = vmatprep.mubr.bf16.mxu0 0
  %148 = vmatmul.mubr.bf16.gmra.mrb[0].mxu0 %v56
  %v149 = vpop.f32.mrb[0].mxu0
  %v150 = vadd.f32 0.0, %v149
  %v151 = vpop.f32.mrb[0].mxu0
  %v152 = vpop.f32.mrb[0].mxu0
  %v153 = vpop.f32.mrb[0].mxu0
  %154 = vdwg.mxu0
  %v155 = vadd.f32 %v27, %v142
  %v156 = vadd.f32 %v28, %v145
  %v157 = vadd.f32 %v29, %v150
  %158 = vst [vmem:[#allocation2] sm:$0xff] %v155
  %159 = vst [vmem:[#allocation2 + $0x8] sm:$0xff] %v156
  %160 = vst [vmem:[#allocation2 + $0x10] sm:$0xff] %v157
  // Predicated region
  $region22: #{rbm_forward.1} parent=0 // pred_check
    %p161 = pneg %p20
  $region23: #{rbm_forward.1} parent=0 // pred_check_branch
    %163 = sbr.rel (%p161) target = $region25
  $region24: #{rbm_forward.1} parent=0 // pred_region
    %v164 = vld [vmem:[#allocation2] sm:$0xff]
    %v165 = vld [vmem:[#allocation2 + $0x8] sm:$0xff]
    %v166 = vld [vmem:[#allocation2 + $0x10] sm:$0xff]
    %v167 = vld [vmem:[%s2] sm:$0x1]
    %v169 = vlaneseq
    %v170 = vshrl.u32 %v169, 7
    %v171 = vsub.s32 0, %v170
    %v172 = vrot.slane %v167, %v171
    %v174 = vadd.f32 %v164, %v172
    %v175 = vadd.f32 %v165, %v172
    %v176 = vadd.f32 %v166, %v172
    %v177 = vxor.u32 %v174, 2147483648
    %v178 = vxor.u32 %v175, 2147483648
    %v179 = vxor.u32 %v176, 2147483648
    %v180 = vmul.f32 %v177, 1.442695
    %v181 = vpow.pop %v180
    %v182 = vmul.f32 %v178, 1.442695
    %v183 = vpow.pop %v182
    %v184 = vmul.f32 %v179, 1.442695
    %v185 = vpow.pop %v184
    %v186 = vadd.f32 %v181, 1.0
    %v187 = vadd.f32 %v183, 1.0
    %v188 = vadd.f32 %v185, 1.0
    %v189 = vrcp.pop %v186
    %v190 = vmul.f32 1.0, %v189
    %v191 = vrcp.pop %v187
    %v192 = vmul.f32 1.0, %v191
    %v193 = vrcp.pop %v188
    %v194 = vmul.f32 1.0, %v193
    %195 = vst [vmem:[%s4] sm:$0xff] %v190
    %196 = vst [vmem:[%s4 + $0x8] sm:$0xff] %v192
    %197 = vst [vmem:[%s4 + $0x10] sm:$0xff] %v194
    %v198 = vld [vmem:[%s3] sm:$0xff]
    %v199 = vld [vmem:[%s3 + $0x8] sm:$0xff]
    %v200 = vld [vmem:[%s3 + $0x10] sm:$0xff]
    %vm201 = vcmp.lt.f32.partialorder %v198, %v190
    %vm202 = vcmp.lt.f32.partialorder %v199, %v192
    %vm203 = vcmp.lt.f32.partialorder %v200, %v194
    %v204 = vsel %vm201, 1, 0
    %v205 = vsel %vm202, 1, 0
    %v206 = vsel %vm203, 1, 0
    %v207 = vcvt.s32.f32 %v204
    %v208 = vcvt.s32.f32 %v205
    %v209 = vcvt.s32.f32 %v206
    %v210 = vpack.c.bf16 %v208, %v207
    %v211 = vpack.c.bf16 %v209, %v209
    %v214 = vunpack.c.l.b16 %v210
    %v215 = vunpack.c.h.b16 %v210
    %v216 = vunpack.c.l.b16 %v211
    %v217 = vpack.c.b16 %v214, %v214
    %v218 = vpack.c.b16 %v215, %v215
    %v219 = vpack.c.b16 %v216, %v216
    %223 = vst [vmem:[%s5] sm:$0xf] %v217
    %224 = vst [vmem:[%s5 + $0x4] sm:$0xf] %v218
    %225 = vst [vmem:[%s5 + $0x8] sm:$0xf] %v219
  $region25: #{rbm_forward.1} parent=0 // pred_fallthru
    _
  // Predicated region
  $region26: #{rbm_forward.1} parent=0 // pred_check
    _
  $region27: #{rbm_forward.1} parent=0 // pred_check_branch
    %227 = sbr.rel (0) target = $region29
  $region28: #{rbm_forward.1} parent=0 // pred_region
    _
  $region29: #{rbm_forward.1} parent=0 // pred_fallthru
    _
  // Predicated region
  $region30: #{rbm_forward.1} parent=0 // pred_check
    _
  $region31: #{rbm_forward.1} parent=0 // pred_check_branch
    %229 = sbr.rel (0) target = $region33
  $region32: #{rbm_forward.1} parent=0 // pred_region
    _
  $region33: #{rbm_forward.1} parent=0 // pred_fallthru
    _
  // Predicated region
  $region34: #{rbm_forward.1} parent=0 // pred_check
    _
  $region35: #{rbm_forward.1} parent=0 // pred_check_branch
    %231 = sbr.rel (0) target = $region37
  $region36: #{rbm_forward.1} parent=0 // pred_region
    _
  $region37: #{rbm_forward.1} parent=0 // pred_fallthru
    _
  // Predicated region
  $region38: #{rbm_forward.1} parent=0 // pred_check
    _
  $region39: #{rbm_forward.1} parent=0 // pred_check_branch
    %233 = sbr.rel (0) target = $region41
  $region40: #{rbm_forward.1} parent=0 // pred_region
    _
  $region41: #{rbm_forward.1} parent=0 // pred_fallthru
    _

</llo_original>
